<compile_context>
chip_gen: v7x
topology: tpu7x:2x2x1
jax: 0.10.0
libtpu: 0.0.40
codegen_flags: <defaults>
</compile_context>

<pallas_src>
import functools

import jax
import jax.numpy as jnp
from jax import lax
from jax.experimental import pallas as pl
from jax.experimental.pallas import tpu as pltpu

EPS = 1e-6


# ----------------------------- in-kernel math helpers -----------------------------

def _ln_cm(x, g, b):
    """LayerNorm over the channel rows (axis 0) of a channel-major (C, N) array."""
    mu = jnp.mean(x, axis=0, keepdims=True)
    var = jnp.mean((x - mu) ** 2, axis=0, keepdims=True)
    return (x - mu) * lax.rsqrt(var + EPS) * g + b


def _gelu(x):
    # tanh-approximate GELU (EUP tanh); PyTorch nn.GELU default is exact erf (~3e-4 abs diff).
    return 0.5 * x * (1.0 + jnp.tanh(0.7978845608028654 * (x + 0.044715 * x * x * x)))


# ------------------------- roll-direction probe (robustness) -----------------------

def _probe_roll_sign():
    """+1 if pltpu.roll matches np.roll (out[i] = in[i - shift]), else -1."""
    def probe(x_ref, o_ref):
        o_ref[...] = pltpu.roll(x_ref[...], 1, axis=1)

    x = jnp.arange(8 * 128, dtype=jnp.float32).reshape(8, 128)
    y = pl.pallas_call(
        probe,
        out_shape=jax.ShapeDtypeStruct((8, 128), jnp.float32),
        grid=(1,),
        in_specs=[pl.BlockSpec((8, 128), lambda i: (0, 0))],
        out_specs=pl.BlockSpec((8, 128), lambda i: (0, 0)),
    )(x)
    return 1 if bool(jnp.all(y == jnp.roll(x, 1, axis=1))) else -1


# Resolved eagerly at import, before any jit trace uses it as a static constant.
_ROLL_SIGN = _probe_roll_sign()


# ----------------------------------- kernels --------------------------------------

def stage_kernel(p_ref, dsw_ref, dsb_ref, dsg_ref, dsbb_ref,
                 dww_ref, dwb_ref, lng_ref, lnb_ref,
                 w1_ref, b1_ref, w2_ref, b2_ref, gamma_ref,
                 o_ref, *, B, H, W, depth, c_prev, stem):
    """Fused stage: downsample (LN + strided conv) + `depth` ConvNeXt blocks, channel-major.

    p_ref:  (Kin, N) bf16 patch matrix, N = B*H*W tokens on lanes
    o_ref:  (C, N) bf16 stage output
    """
    f32 = jnp.float32
    N = B * H * W

    # ---- downsample / stem: patch matmul on the MXU (+ channels_first LayerNorm) ----
    if stem:
        # Conv2d(k=4,s=4) as (C,48)@(48,N), then channels_first LN over the C rows.
        x = jnp.dot(dsw_ref[...], p_ref[...], preferred_element_type=f32) + dsb_ref[...]
        x = _ln_cm(x, dsg_ref[...], dsbb_ref[...])
    else:
        # channels_first LN of the previous feature map == per-token LN of each c_prev slice
        # of the 2x2 patch rows, then Conv2d(k=2,s=2) as one (C,4*c_prev)@(4*c_prev,N) matmul.
        g, bb = dsg_ref[...], dsbb_ref[...]
        parts = []
        for a in range(4):
            sl = p_ref[a * c_prev:(a + 1) * c_prev, :].astype(f32)
            parts.append(_ln_cm(sl, g, bb).astype(jnp.bfloat16))
        y = jnp.concatenate(parts, axis=0)
        x = jnp.dot(dsw_ref[...], y, preferred_element_type=f32) + dsb_ref[...]

    # ---- per-token row/col masks for the 7x7 taps (built once, reused by every block) ----
    tok = lax.broadcasted_iota(jnp.int32, (1, N), 1)
    col = tok % W
    row = (tok // W) % H            # per-image row: also rejects cross-image / wrap-around taps
    cmask = [((col + (dj - 3) >= 0) & (col + (dj - 3) < W)).astype(f32) for dj in range(7)]
    rmask = [((row + (di - 3) >= 0) & (row + (di - 3) < H)).astype(f32) for di in range(7)]

    # ---- ConvNeXt blocks; activation stays in VMEM/vregs for the whole stage ----
    for d in range(depth):
        # 7x7 depthwise conv on the token (lane) axis: XLU lane rolls + VPU mask/weight MACs.
        acc = jnp.zeros_like(x)
        for di in range(7):
            rsh = (_ROLL_SIGN * (3 - di) * W) % N
            xr = pltpu.roll(x, rsh, axis=1) if rsh else x
            xr = xr * rmask[di]
            for dj in range(7):
                csh = (_ROLL_SIGN * (3 - dj)) % N
                t = pltpu.roll(xr, csh, axis=1) if csh else xr
                acc = acc + (t * cmask[dj]) * dww_ref[d, di * 7 + dj]
        xd = acc + dwb_ref[d]

        # LN -> pwconv1 -> GELU -> pwconv2 -> layer scale -> +residual (all lane-dense)
        y = _ln_cm(xd, lng_ref[d], lnb_ref[d])
        h = jnp.dot(w1_ref[d], y.astype(jnp.bfloat16), preferred_element_type=f32) + b1_ref[d]
        h = _gelu(h)
        z = jnp.dot(w2_ref[d], h.astype(jnp.bfloat16), preferred_element_type=f32) + b2_ref[d]
        x = x + gamma_ref[d] * z

    o_ref[...] = x.astype(o_ref.dtype)


def head_kernel(x_ref, p_ref, g_ref, b_ref, w_ref, hb_ref, o_ref):
    """Global average pool (as a matmul) -> LayerNorm -> classifier, channel-major."""
    x = x_ref[...].astype(jnp.float32)                                       # (C, B*N)
    pooled = jnp.dot(x, p_ref[...], preferred_element_type=jnp.float32)      # (C, B)
    y = _ln_cm(pooled, g_ref[...], b_ref[...])
    o_ref[...] = jnp.dot(w_ref[...], y.astype(jnp.bfloat16),
                         preferred_element_type=jnp.float32) + hb_ref[...]   # (K, B)


# ---------------------------------- wrappers ---------------------------------------

def _full_specs(args):
    return [pl.BlockSpec(a.shape, lambda i, n=a.ndim: (0,) * n) for a in args]


def pallas_stage(patches, ds, blk, *, B, H, W, stem):
    D, _, C, _ = blk['dw_w'].shape
    c_prev = ds['ln_g'].shape[0]
    N = B * H * W
    args = (patches, ds['w'], ds['b'], ds['ln_g'], ds['ln_b'],
            blk['dw_w'], blk['dw_b'], blk['ln_g'], blk['ln_b'],
            blk['w1'], blk['b1'], blk['w2'], blk['b2'], blk['gamma'])
    kern = functools.partial(stage_kernel, B=B, H=H, W=W, depth=D, c_prev=c_prev, stem=stem)
    return pl.pallas_call(
        kern,
        out_shape=jax.ShapeDtypeStruct((C, N), jnp.bfloat16),
        grid=(1,),
        in_specs=_full_specs(args),
        out_specs=pl.BlockSpec((C, N), lambda i: (0, 0)),
        compiler_params=pltpu.CompilerParams(dimension_semantics=("arbitrary",)),
    )(*args)


def pallas_head(x_cm, pool, g, b, w, hb):
    K = w.shape[0]
    Bn = pool.shape[1]
    args = (x_cm, pool, g, b, w, hb)
    return pl.pallas_call(
        head_kernel,
        out_shape=jax.ShapeDtypeStruct((K, Bn), jnp.float32),
        grid=(1,),
        in_specs=_full_specs(args),
        out_specs=pl.BlockSpec((K, Bn), lambda i: (0, 0)),
    )(*args)


# ------------------------------- model (glue) ---------------------------------------

def paprconvnext_forward(params, x_nchw):
    x = x_nchw.astype(jnp.bfloat16)
    B, Cin, Hi, Wi = x.shape
    H, W = Hi // 4, Wi // 4
    # stem 4x4 patches, channel-major: rows ordered (ki, kj, cin), columns ordered (b, i, j)
    t = x.reshape(B, Cin, H, 4, W, 4)
    patches = jnp.transpose(t, (3, 5, 1, 0, 2, 4)).reshape(16 * Cin, B * H * W)

    x_cm = None
    for i in range(4):
        x_cm = pallas_stage(patches, params['down'][i], params['stages'][i],
                            B=B, H=H, W=W, stem=(i == 0))
        if i < 3:
            C = x_cm.shape[0]
            Ho, Wo = H // 2, W // 2
            # 2x2 patch gather for the next downsample (only inter-kernel XLA op, bf16)
            t = x_cm.reshape(C, B, Ho, 2, Wo, 2)
            patches = jnp.transpose(t, (3, 5, 0, 1, 2, 4)).reshape(4 * C, B * Ho * Wo)
            H, W = Ho, Wo

    N = H * W
    pool = jnp.repeat(jnp.eye(B, dtype=jnp.float32), N, axis=0) / float(N)   # (B*N, B)
    logits = pallas_head(x_cm, pool, params['norm_g'], params['norm_b'],
                         params['head_w'], params['head_b'])
    return logits.T                                                          # (B, num_classes)


# ------------------------------ parameter init --------------------------------------

def _trunc_normal(key, shape, std=0.02):
    return std * jax.random.truncated_normal(key, -2.0, 2.0, shape, jnp.float32)


def init_params(key, in_chans=3, num_classes=10, depths=(1, 1, 2, 1), dims=(8, 16, 32, 64)):
    keys = iter(jax.random.split(key, 64))
    params = {'down': [], 'stages': []}

    # stem: Conv2d(in_chans, dims[0], 4, 4) stored as (C0, 48), columns (ki, kj, cin); then LN
    params['down'].append(dict(
        w=_trunc_normal(next(keys), (dims[0], 16 * in_chans)).astype(jnp.bfloat16),
        b=jnp.zeros((dims[0], 1), jnp.float32),
        ln_g=jnp.ones((dims[0], 1), jnp.float32),
        ln_b=jnp.zeros((dims[0], 1), jnp.float32)))
    # downsample i: channels_first LN(dims[i]) + Conv2d(dims[i], dims[i+1], 2, 2),
    # weight stored (C_{i+1}, 4*C_i) with columns (ki, kj, cin)
    for i in range(3):
        params['down'].append(dict(
            ln_g=jnp.ones((dims[i], 1), jnp.float32),
            ln_b=jnp.zeros((dims[i], 1), jnp.float32),
            w=_trunc_normal(next(keys), (dims[i + 1], 4 * dims[i])).astype(jnp.bfloat16),
            b=jnp.zeros((dims[i + 1], 1), jnp.float32)))

    # PaPrBlocks, weights stacked along a leading depth axis (whole stage = one kernel)
    for i in range(4):
        d, dep = dims[i], depths[i]
        params['stages'].append(dict(
            dw_w=_trunc_normal(next(keys), (dep, 49, d, 1)),          # tap k = di*7+dj
            dw_b=jnp.zeros((dep, d, 1), jnp.float32),
            ln_g=jnp.ones((dep, d, 1), jnp.float32),
            ln_b=jnp.zeros((dep, d, 1), jnp.float32),
            w1=_trunc_normal(next(keys), (dep, 4 * d, d)).astype(jnp.bfloat16),   # Linear(d,4d)
            b1=jnp.zeros((dep, 4 * d, 1), jnp.float32),
            w2=_trunc_normal(next(keys), (dep, d, 4 * d)).astype(jnp.bfloat16),   # Linear(4d,d)
            b2=jnp.zeros((dep, d, 1), jnp.float32),
            gamma=1e-6 * jnp.ones((dep, d, 1), jnp.float32)))

    params['norm_g'] = jnp.ones((dims[-1], 1), jnp.float32)
    params['norm_b'] = jnp.zeros((dims[-1], 1), jnp.float32)
    params['head_w'] = _trunc_normal(next(keys), (num_classes, dims[-1])).astype(jnp.bfloat16)
    params['head_b'] = jnp.zeros((num_classes, 1), jnp.float32)
    return params


# --------------------------- pure-JAX f32 reference (NCHW) ---------------------------

def reference_forward(params, x_nchw):
    x = x_nchw.astype(jnp.float32)

    def ln_cf(v, g, b):                               # channels_first LayerNorm
        u = v.mean(1, keepdims=True)
        s = ((v - u) ** 2).mean(1, keepdims=True)
        return (v - u) / jnp.sqrt(s + EPS) * g.reshape(1, -1, 1, 1) + b.reshape(1, -1, 1, 1)

    for i in range(4):
        ds = params['down'][i]
        if i == 0:
            w = ds['w'].astype(jnp.float32)
            c0 = w.shape[0]
            wk = w.reshape(c0, 4, 4, x.shape[1]).transpose(0, 3, 1, 2)
            x = lax.conv_general_dilated(x, wk, (4, 4), 'VALID',
                                         dimension_numbers=('NCHW', 'OIHW', 'NCHW'))
            x = x + ds['b'].reshape(1, -1, 1, 1)
            x = ln_cf(x, ds['ln_g'][:, 0], ds['ln_b'][:, 0])
        else:
            x = ln_cf(x, ds['ln_g'][:, 0], ds['ln_b'][:, 0])
            w = ds['w'].astype(jnp.float32)
            c2, cp = w.shape[0], w.shape[1] // 4
            wk = w.reshape(c2, 2, 2, cp).transpose(0, 3, 1, 2)
            x = lax.conv_general_dilated(x, wk, (2, 2), 'VALID',
                                         dimension_numbers=('NCHW', 'OIHW', 'NCHW'))
            x = x + ds['b'].reshape(1, -1, 1, 1)

        blk = params['stages'][i]
        dep, c = blk['dw_b'].shape[0], blk['dw_b'].shape[1]
        for d in range(dep):
            inp = x
            dw = blk['dw_w'][d, :, :, 0].reshape(7, 7, c).transpose(2, 0, 1)[:, None]
            x = lax.conv_general_dilated(x, dw, (1, 1), [(3, 3), (3, 3)],
                                         dimension_numbers=('NCHW', 'OIHW', 'NCHW'),
                                         feature_group_count=c)
            x = x + blk['dw_b'][d].reshape(1, -1, 1, 1)
            xl = x.transpose(0, 2, 3, 1)
            mu = xl.mean(-1, keepdims=True)
            var = ((xl - mu) ** 2).mean(-1, keepdims=True)
            y = (xl - mu) / jnp.sqrt(var + EPS) * blk['ln_g'][d, :, 0] + blk['ln_b'][d, :, 0]
            h = _gelu(y @ blk['w1'][d].astype(jnp.float32).T + blk['b1'][d, :, 0])
            z = h @ blk['w2'][d].astype(jnp.float32).T + blk['b2'][d, :, 0]
            z = z * blk['gamma'][d, :, 0]
            x = inp + z.transpose(0, 3, 1, 2)

    feat = x.mean((2, 3))
    mu = feat.mean(-1, keepdims=True)
    var = ((feat - mu) ** 2).mean(-1, keepdims=True)
    y = (feat - mu) / jnp.sqrt(var + EPS) * params['norm_g'][:, 0] + params['norm_b'][:, 0]
    return y @ params['head_w'].astype(jnp.float32).T + params['head_b'][:, 0]


# ------------------------------------ main -------------------------------------------

if __name__ == "__main__":
    key = jax.random.PRNGKey(0)
    pkey, xkey = jax.random.split(key)

    params = init_params(pkey, in_chans=3, num_classes=10,
                         depths=(1, 1, 2, 1), dims=(8, 16, 32, 64))
    # 128x128 input -> spatial 32/16/8/4 per stage; all token counts are multiples of 8.
    x = jax.random.normal(xkey, (2, 3, 128, 128), jnp.float32)

    fwd = jax.jit(paprconvnext_forward)
    logits = fwd(params, x)
    jax.block_until_ready(logits)
    assert logits.shape == (2, 10) and logits.dtype == jnp.float32
    assert bool(jnp.all(jnp.isfinite(logits)))

    # Numerical check vs. a pure-JAX f32 reference (bf16 activations/weights -> loose tol).
    ref = jax.jit(reference_forward)(params, x)
    err = float(jnp.max(jnp.abs(logits - ref)))
    assert err < 3e-2, f"mismatch vs reference: {err}"
    print("KERNEL_OK")
</pallas_src>

<mosaic_0001>
module attributes {stable_mosaic.version = 11 : i64} {
  func.func @probe(%arg0: i32, %arg1: memref<8x128xf32, #tpu.memory_space<vmem>>, %arg2: memref<8x128xf32, #tpu.memory_space<vmem>>) attributes {dimension_semantics = [#tpu.dimension_semantics<arbitrary>], iteration_bounds = array<i64: 1>, scalar_prefetch = 0 : i64, scratch_operands = 0 : i64, tpu.core_type = #tpu.core_type<tc>, window_params = [{pipeline_mode = #tpu.pipeline_mode<synchronous>, transform_indices = @transform_0, window_bounds = array<i64: 8, 128>}, {pipeline_mode = #tpu.pipeline_mode<synchronous>, transform_indices = @transform_1, window_bounds = array<i64: 8, 128>}]} {
    %c0 = arith.constant 0 : index
    %c0_0 = arith.constant 0 : index
    %0 = vector.load %arg1[%c0, %c0_0] : memref<8x128xf32, #tpu.memory_space<vmem>>, vector<8x128xf32>
    %c1_i32 = arith.constant 1 : i32
    %1 = tpu.dynamic_rotate %0 by %c1_i32 dim 1 : vector<8x128xf32>, i32 -> vector<8x128xf32>
    %c0_1 = arith.constant 0 : index
    %c0_2 = arith.constant 0 : index
    %2 = vector.load %arg2[%c0_1, %c0_2] : memref<8x128xf32, #tpu.memory_space<vmem>>, vector<8x128xf32>
    tpu.vector_store %arg2[%c0_1, %c0_2], %1 {strides = array<i32>} : memref<8x128xf32, #tpu.memory_space<vmem>>, vector<8x128xf32>,
    return
  }
  func.func @transform_0(%arg0: i32) -> (i32, i32) {
    %c0_i32 = arith.constant 0 : i32
    %c0_i32_0 = arith.constant 0 : i32
    %c0_i32_1 = arith.constant 0 : i32
    return %c0_i32, %c0_i32_0 : i32, i32
  }
  func.func @transform_1(%arg0: i32) -> (i32, i32) {
    %c0_i32 = arith.constant 0 : i32
    %c0_i32_0 = arith.constant 0 : i32
    %c0_i32_1 = arith.constant 0 : i32
    return %c0_i32, %c0_i32_0 : i32, i32
  }
}

</mosaic_0001>

<llo_original>
// kernel: tpu_custom_call.1
$region0: #{tpu_custom_call.1}
  #allocation0 [shape = 'u32[]', space=smem, size = 0x4, offset = 0x4, fixed_abs, tag = 'smem constant byte address 0x4 - core index']
  #allocation1 [shape = 'u32[144,128]{1,0:T(1,128)}', space=vmem, size = 0x12000, scoped, tag = 'internal scratch']
  %s0 = inlined_call_operand.hbm [shape: f32[8,128], index: 0, kind: input, shape index: {}]
  %s1 = inlined_call_operand.hbm [shape: f32[8,128], index: 1, kind: output, shape index: {}]
  %s2 = sld [smem:[#allocation0]]
  $region18: #{tpu_custom_call.1} parent=0
    _
  %s4 = ssub.s32 1, %s2
  %s5 = scalar_select 0, %s4, %s2
  $region1: #{tpu_custom_call.1} parent=0
    #allocation2 [shape = 'u8[4096]{0}', space=vmem, size = 0x1000, scoped, tag = 'input window, operand 0, single buffered']
    #allocation3 [shape = 's32[1]{0}', space=sflag, size = 0x4, scoped, tag = 'scoped memory for tpu_custom_call.1']
    #allocation4 [shape = 's32[1]{0}', space=sflag, size = 0x4, scoped, tag = 'scoped memory for tpu_custom_call.1']
    #allocation5 [shape = 'u8[4096]{0}', space=vmem, size = 0x1000, scoped, tag = 'output window, operand 0, single buffered']
    %6 = vsyncpa [#allocation3], 0
    %7 = vsyncpa [#allocation4], 0
    // Predicated region
    $region2: #{tpu_custom_call.1} parent=1 // pred_check
      _
    $region3: #{tpu_custom_call.1} parent=1 // pred_check_branch
      %9 = sbr.rel (0) target = $region5
    $region4: #{tpu_custom_call.1} parent=1 // pred_region
      %s11 = ssub.s32 128, 128
      %12 = vsyncadd [#allocation3], %s11
      %s14 = sshll.u32 [#allocation2], 4
      %s15 = int_to_ptr.vmem [resolvable:$true] %s14
      %17 = dma.hbm_to_vmem [thread:$0]  %s0, 128, %s15, [#allocation3]
    $region5: #{tpu_custom_call.1} parent=1 // pred_fallthru
      _
    // Predicated region
    $region6: #{tpu_custom_call.1} parent=1 // pred_check
      _
    $region7: #{tpu_custom_call.1} parent=1 // pred_check_branch
      %19 = sbr.rel (0) target = $region9
    $region8: #{tpu_custom_call.1} parent=1 // pred_region
      %20 = dma.done [#allocation3], 128
    $region9: #{tpu_custom_call.1} parent=1 // pred_fallthru
      _
    %v21 = vld [vmem:[#allocation2] sm:$0xff]
    %22 = vrot.lane.b32.xlu0 %v21, 1
    %v23 = vpop.permute.xlu0 %22
    %24 = vst [vmem:[#allocation5] sm:$0xff] %v23
    // Predicated region
    $region10: #{tpu_custom_call.1} parent=1 // pred_check
      _
    $region11: #{tpu_custom_call.1} parent=1 // pred_check_branch
      %26 = sbr.rel (0) target = $region13
    $region12: #{tpu_custom_call.1} parent=1 // pred_region
      %s28 = ssub.s32 128, 128
      %29 = vsyncadd [#allocation4], %s28
      %s31 = sshll.u32 [#allocation5], 4
      %s32 = int_to_ptr.vmem [resolvable:$true] %s31
      %34 = dma.vmem_to_hbm [thread:$0]  %s32, 128, %s1, [#allocation4]
    $region13: #{tpu_custom_call.1} parent=1 // pred_fallthru
      _
    // Predicated region
    $region14: #{tpu_custom_call.1} parent=1 // pred_check
      _
    $region15: #{tpu_custom_call.1} parent=1 // pred_check_branch
      %36 = sbr.rel (0) target = $region17
    $region16: #{tpu_custom_call.1} parent=1 // pred_region
      %37 = dma.done [#allocation4], 128
    $region17: #{tpu_custom_call.1} parent=1 // pred_fallthru
      _
    %38 = vsyncpa [#allocation3], 1
    %39 = vsyncpa [#allocation4], 1

</llo_original>
